<compile_context>
chip_gen: v7x
topology: tpu7x:2x2x1
jax: 0.10.0
libtpu: 0.0.40
codegen_flags: <defaults>
</compile_context>

<pallas_src>
import functools
import math

import jax
import jax.numpy as jnp
from jax import lax
from jax.experimental import pallas as pl
from jax.experimental.pallas import tpu as pltpu

LN_EPS = 1e-5      # nn.LayerNorm default
_LANE = 128
_SUBLANE = 8


def _round_up(x, m):
    return (x + m - 1) // m * m


# ---------------------------------------------------------------------------
# Generation-aware defaults
# ---------------------------------------------------------------------------
def _device_kind():
    try:
        return jax.devices()[0].device_kind.lower()
    except Exception:          # pragma: no cover - best-effort hardware query
        return ""


def _vmem_capacity_bytes():
    try:
        cap = getattr(pltpu.get_tpu_info(), "vmem_capacity_bytes", None)
        if cap:
            return int(cap)
    except Exception:          # pragma: no cover - best-effort hardware query
        pass
    return 64 * 1024 * 1024 if "v7" in _device_kind() else 128 * 1024 * 1024


def _default_block_m():
    kind = _device_kind()
    if "v5" in kind:
        return 256   # v5e: 4x128 MXU, bigger M mostly adds f32 live range
    if "v7" in kind:
        return 256   # v7x: 64 MiB VMEM -> keep tiles modest
    return 512       # v6e (and fallback): 128 MiB VMEM, feed long M runs


def _vmem_limit_bytes():
    cap = _vmem_capacity_bytes()
    # ~80% of physical VMEM, leaving headroom for compiler-internal scratch
    # and the double-buffered x / weight-tile / output buffers.
    return int(max(32 * 1024 * 1024, min(int(cap * 0.8), 112 * 1024 * 1024)))


# ---------------------------------------------------------------------------
# One-time feature detection for single-buffered (constant) operands.
# A probe failure only means "don't request Buffered(1)"; the real kernel
# build has NO fallback, so genuine errors are not masked.
# ---------------------------------------------------------------------------
_BUFFERED1_SUPPORTED = None


def _buffered_one_supported():
    global _BUFFERED1_SUPPORTED
    if _BUFFERED1_SUPPORTED is not None:
        return _BUFFERED1_SUPPORTED
    try:
        def _probe(a_ref, o_ref):
            o_ref[...] = a_ref[...] + 1.0

        out = pl.pallas_call(
            _probe,
            out_shape=jax.ShapeDtypeStruct((8, 128), jnp.float32),
            grid_spec=pltpu.PrefetchScalarGridSpec(
                num_scalar_prefetch=0,
                grid=(2,),
                in_specs=[pl.BlockSpec((8, 128), lambda i: (0, 0),
                                       pipeline_mode=pl.Buffered(1))],
                out_specs=pl.BlockSpec((8, 128), lambda i: (0, 0)),
            ),
        )(jnp.zeros((8, 128), jnp.float32))
        jax.block_until_ready(out)
        _BUFFERED1_SUPPORTED = True
    except Exception:
        _BUFFERED1_SUPPORTED = False
    return _BUFFERED1_SUPPORTED


# ---------------------------------------------------------------------------
# Kernel
# ---------------------------------------------------------------------------
def _mlp_kernel(
    x_ref,        # (tm, E_pad)       f32 token rows
    g1_ref,       # (1, E_pad)        ln1 weight (f32, zero-padded)
    be1_ref,      # (1, E_pad)        ln1 bias
    w1_ref,       # (E_pad, bh)       ff1 weight tile (bf16)
    b1_ref,       # (1, bh)           ff1 bias tile
    w2_ref,       # (bh, E_pad)       ff2 weight tile (bf16)
    b2_ref,       # (1, E_pad)        ff2 bias
    g2_ref,       # (1, E_pad)        ln2 weight
    be2_ref,      # (1, E_pad)        ln2 bias
    wo_ref,       # (E_pad, O_pad)    output weight (bf16)
    bo_ref,       # (1, O_pad)        output bias
    o_ref,        # (tm, O_pad)
    xn_scr,       # (tm, E_pad)       cached ln1(x), MXU dtype
    acc_scr,      # (tm, E_pad)       f32 accumulator for ff2 output
    *, inv_e, eps, approx_gelu,
):
    j = pl.program_id(1)

    @pl.when(j == 0)
    def _init():
        # ln1(x): fused single-pass mean / variance (sum + sum-of-squares).
        # inv_e divides by the *real* E, so zero-padded lanes are exact.
        x = x_ref[...]
        s = jnp.sum(x, axis=-1, keepdims=True)
        ss = jnp.sum(x * x, axis=-1, keepdims=True)
        mu = s * inv_e
        var = jnp.maximum(ss * inv_e - mu * mu, 0.0)
        xn = (x - mu) * lax.rsqrt(var + eps) * g1_ref[...] + be1_ref[...]
        xn_scr[...] = xn.astype(xn_scr.dtype)
        acc_scr[...] = jnp.zeros_like(acc_scr)

    # ---- streamed hidden tile: gelu(xn @ w1[:, j]) @ w2[j, :]  (f32 acc) ----
    h = jnp.dot(xn_scr[...], w1_ref[...],
                preferred_element_type=jnp.float32) + b1_ref[...]
    if approx_gelu:
        c = math.sqrt(2.0 / math.pi)
        h = 0.5 * h * (1.0 + jnp.tanh(c * (h + 0.044715 * (h * h * h))))
    else:
        # exact erf form == F.gelu default
        h = 0.5 * h * (1.0 + lax.erf(h * (1.0 / math.sqrt(2.0))))
    acc_scr[...] += jnp.dot(h.astype(w2_ref.dtype), w2_ref[...],
                            preferred_element_type=jnp.float32)

    @pl.when(j == pl.num_programs(1) - 1)
    def _finish():
        # residual (dropout is identity in eval mode) + ln2 + output layer.
        r = x_ref[...] + acc_scr[...] + b2_ref[...]
        s = jnp.sum(r, axis=-1, keepdims=True)
        ss = jnp.sum(r * r, axis=-1, keepdims=True)
        mu = s * inv_e
        var = jnp.maximum(ss * inv_e - mu * mu, 0.0)
        rn = (r - mu) * lax.rsqrt(var + eps) * g2_ref[...] + be2_ref[...]
        out = jnp.dot(rn.astype(wo_ref.dtype), wo_ref[...],
                      preferred_element_type=jnp.float32) + bo_ref[...]
        o_ref[...] = out.astype(o_ref.dtype)


# ---------------------------------------------------------------------------
# Parameter preparation (do once, outside the per-call path)
# ---------------------------------------------------------------------------
def _pad2(a, rows, cols):
    r, c = a.shape
    if r == rows and c == cols:
        return a
    return jnp.pad(a, ((0, rows - r), (0, cols - c)))


def prepare_params(params, *, weight_dtype=jnp.bfloat16, block_h=512):
    """Cast weights to the MXU dtype and zero-pad E/H/O to lane multiples.

    block_h: hidden-dim streaming tile (multiple of 128).  If H fits in one
    tile the kernel degenerates to fully-resident weights (DMA'd once)."""
    E, H = params["w1"].shape
    O = params["wo"].shape[1]
    E_pad = _round_up(E, _LANE)
    O_pad = _round_up(O, _LANE)
    block_h = _round_up(max(block_h, _LANE), _LANE)
    H_pad = _round_up(H, _LANE)
    if H_pad <= block_h:
        block_h = H_pad                      # single H step
    else:
        H_pad = _round_up(H, block_h)        # stream H in block_h chunks

    return dict(
        _prepared=True, E=E, H=H, O=O,
        E_pad=E_pad, H_pad=H_pad, O_pad=O_pad, block_h=block_h,
        # LN gamma/beta zero-padded -> padded lanes of ln(x) are exactly 0.
        ln1_w=_pad2(params["ln1_w"], 1, E_pad),
        ln1_b=_pad2(params["ln1_b"], 1, E_pad),
        ln2_w=_pad2(params["ln2_w"], 1, E_pad),
        ln2_b=_pad2(params["ln2_b"], 1, E_pad),
        w1=_pad2(params["w1"], E_pad, H_pad).astype(weight_dtype),
        b1=_pad2(params["b1"], 1, H_pad),
        w2=_pad2(params["w2"], H_pad, E_pad).astype(weight_dtype),
        b2=_pad2(params["b2"], 1, E_pad),
        wo=_pad2(params["wo"], E_pad, O_pad).astype(weight_dtype),
        bo=_pad2(params["bo"], 1, O_pad),
    )


# ---------------------------------------------------------------------------
# Wrapper
# ---------------------------------------------------------------------------
def transformer_mlp(x, params, *, block_m=None, block_h=512,
                    weight_dtype=jnp.bfloat16, approx_gelu=False):
    """x: [B, S, E].  params: raw dict from init_params or prepare_params()."""
    if not params.get("_prepared", False):
        params = prepare_params(params, weight_dtype=weight_dtype,
                                block_h=block_h)
    p = params
    E, O = p["E"], p["O"]
    E_pad, H_pad, O_pad, bh = p["E_pad"], p["H_pad"], p["O_pad"], p["block_h"]

    B, S, E_in = x.shape
    assert E_in == E, (E_in, E)
    M = B * S

    if block_m is None:
        block_m = _default_block_m()
    block_m = max(_SUBLANE,
                  min(_round_up(block_m, _SUBLANE), _round_up(M, _SUBLANE)))
    M_pad = _round_up(M, block_m)
    grid = (M_pad // block_m, H_pad // bh)

    x2d = x.reshape(M, E).astype(jnp.float32)
    if M_pad != M or E_pad != E:
        x2d = jnp.pad(x2d, ((0, M_pad - M), (0, E_pad - E)))

    # Advisory cost estimate for XLA scheduling around the fused call.
    wbytes = int(p["w1"].dtype.itemsize)
    flops = int(2 * M_pad * (2 * E_pad * H_pad + E_pad * O_pad))
    bytes_accessed = int(
        x2d.size * 4 + M_pad * O_pad * 4
        + grid[0] * (int(p["w1"].size) + int(p["w2"].size)) * wbytes
        + int(p["wo"].size) * wbytes
        + (grid[0] * int(p["b1"].size) + int(p["b2"].size)
           + int(p["bo"].size) + 4 * E_pad) * 4)
    cost = pl.CostEstimate(flops=flops, transcendentals=int(M_pad * H_pad),
                           bytes_accessed=bytes_accessed)

    kernel = functools.partial(_mlp_kernel, inv_e=1.0 / E, eps=LN_EPS,
                               approx_gelu=approx_gelu)

    buffered_one = pl.Buffered(1) if _buffered_one_supported() else None

    def const_spec(shape):
        # Constant-index operands: DMA'd once; single-buffered if supported.
        if buffered_one is None:
            return pl.BlockSpec(shape, lambda i, j: (0, 0))
        return pl.BlockSpec(shape, lambda i, j: (0, 0),
                            pipeline_mode=buffered_one)

    in_specs = [
        pl.BlockSpec((block_m, E_pad), lambda i, j: (i, 0)),   # x rows
        const_spec((1, E_pad)),                                # ln1 w
        const_spec((1, E_pad)),                                # ln1 b
        pl.BlockSpec((E_pad, bh), lambda i, j: (0, j)),        # ff1 w tile
        pl.BlockSpec((1, bh), lambda i, j: (0, j)),            # ff1 b tile
        pl.BlockSpec((bh, E_pad), lambda i, j: (j, 0)),        # ff2 w tile
        const_spec((1, E_pad)),                                # ff2 b
        const_spec((1, E_pad)),                                # ln2 w
        const_spec((1, E_pad)),                                # ln2 b
        const_spec((E_pad, O_pad)),                            # out w
        const_spec((1, O_pad)),                                # out b
    ]

    out2d = pl.pallas_call(
        kernel,
        out_shape=jax.ShapeDtypeStruct((M_pad, O_pad), x.dtype),
        grid_spec=pltpu.PrefetchScalarGridSpec(
            num_scalar_prefetch=0,
            grid=grid,
            in_specs=in_specs,
            out_specs=pl.BlockSpec((block_m, O_pad), lambda i, j: (i, 0)),
            scratch_shapes=[
                pltpu.VMEM((block_m, E_pad), p["w1"].dtype),   # cached ln1(x)
                pltpu.VMEM((block_m, E_pad), jnp.float32),     # ff2 accumulator
            ],
        ),
        compiler_params=pltpu.CompilerParams(
            dimension_semantics=("parallel", "arbitrary"),  # M parallel, H reduce
            vmem_limit_bytes=_vmem_limit_bytes(),
        ),
        cost_estimate=cost,
    )(
        x2d,
        p["ln1_w"], p["ln1_b"], p["w1"], p["b1"], p["w2"], p["b2"],
        p["ln2_w"], p["ln2_b"], p["wo"], p["bo"],
    )

    return out2d[:M, :O].reshape(B, S, O)


# ---------------------------------------------------------------------------
# Init + pure-JAX reference (eval mode)
# ---------------------------------------------------------------------------
def init_params(key, emb_dim, h_dim, out_dim):
    """nn.Linear-style init (uniform +-1/sqrt(fan_in)), nn.LayerNorm (1, 0).
    Linear weights stored as [in, out]."""
    ks = jax.random.split(key, 6)

    def linear(kw, kb, fan_in, fan_out):
        bound = 1.0 / math.sqrt(fan_in)
        w = jax.random.uniform(kw, (fan_in, fan_out), jnp.float32, -bound, bound)
        b = jax.random.uniform(kb, (1, fan_out), jnp.float32, -bound, bound)
        return w, b

    w1, b1 = linear(ks[0], ks[1], emb_dim, h_dim)
    w2, b2 = linear(ks[2], ks[3], h_dim, emb_dim)
    wo, bo = linear(ks[4], ks[5], emb_dim, out_dim)
    return dict(
        ln1_w=jnp.ones((1, emb_dim), jnp.float32),
        ln1_b=jnp.zeros((1, emb_dim), jnp.float32),
        ln2_w=jnp.ones((1, emb_dim), jnp.float32),
        ln2_b=jnp.zeros((1, emb_dim), jnp.float32),
        w1=w1, b1=b1, w2=w2, b2=b2, wo=wo, bo=bo,
    )


def reference_forward(x, p, weight_dtype=jnp.bfloat16, approx_gelu=False):
    """Pure-JAX reference (eval mode) with matching bf16 weight quantization."""
    def ln(v, g, b):
        mu = jnp.mean(v, -1, keepdims=True)
        var = jnp.mean(jnp.square(v - mu), -1, keepdims=True)
        return (v - mu) * lax.rsqrt(var + LN_EPS) * g + b

    w1 = p["w1"].astype(weight_dtype)
    w2 = p["w2"].astype(weight_dtype)
    wo = p["wo"].astype(weight_dtype)

    xn = ln(x, p["ln1_w"][0], p["ln1_b"][0])
    h = jnp.dot(xn.astype(weight_dtype), w1,
                preferred_element_type=jnp.float32) + p["b1"][0]
    if approx_gelu:
        c = math.sqrt(2.0 / math.pi)
        h = 0.5 * h * (1.0 + jnp.tanh(c * (h + 0.044715 * (h * h * h))))
    else:
        h = 0.5 * h * (1.0 + lax.erf(h / jnp.sqrt(2.0)))
    y = jnp.dot(h.astype(weight_dtype), w2,
                preferred_element_type=jnp.float32) + p["b2"][0]
    r = ln(x + y, p["ln2_w"][0], p["ln2_b"][0])
    return jnp.dot(r.astype(weight_dtype), wo,
                   preferred_element_type=jnp.float32) + p["bo"][0]


if __name__ == "__main__":
    key = jax.random.PRNGKey(0)
    kx, kp, kx2, kp2 = jax.random.split(key, 4)

    # Config A: E=32, H=64, O=8 (E/O padded to 128, single H tile).
    E, H, O = 32, 64, 8
    raw = init_params(kp, E, H, O)
    prepared = prepare_params(raw)          # cast/pad weights once, reuse below

    batch, seq = 2, 8
    x = jax.random.normal(kx, (batch, seq, E), jnp.float32)

    # Test 1: default (generation-aware, clamped) block_m.
    out = jax.block_until_ready(transformer_mlp(x, prepared))
    ref = reference_forward(x, raw)
    assert out.shape == (batch, seq, O), out.shape
    assert jnp.allclose(out, ref, atol=2e-3, rtol=2e-3), float(
        jnp.max(jnp.abs(out - ref)))

    # Test 2: ragged token count (M=15 -> padded internally).
    x2 = jax.random.normal(kx2, (3, 5, E), jnp.float32)
    out2 = jax.block_until_ready(transformer_mlp(x2, prepared))
    ref2 = reference_forward(x2, raw)
    assert out2.shape == (3, 5, O), out2.shape
    assert jnp.allclose(out2, ref2, atol=2e-3, rtol=2e-3), float(
        jnp.max(jnp.abs(out2 - ref2)))

    # Test 3: multi-step M grid (block_m=8 -> grid_m=2).
    out3 = jax.block_until_ready(transformer_mlp(x, prepared, block_m=8))
    assert jnp.allclose(out3, ref, atol=2e-3, rtol=2e-3), float(
        jnp.max(jnp.abs(out3 - ref)))

    # Test 4: H=256 with block_h=128 -> grid_h=2, exercising the streamed
    # hidden-dim accumulator path used at transformer scale.
    E2, H2, O2 = 32, 256, 8
    raw_b = init_params(kp2, E2, H2, O2)
    prep_b = prepare_params(raw_b, block_h=128)
    out4 = jax.block_until_ready(transformer_mlp(x, prep_b, block_m=8))
    ref4 = reference_forward(x, raw_b)
    assert out4.shape == (batch, seq, O2), out4.shape
    assert jnp.allclose(out4, ref4, atol=2e-3, rtol=2e-3), float(
        jnp.max(jnp.abs(out4 - ref4)))

    print("KERNEL_OK")
</pallas_src>

<mosaic_0001>
module attributes {stable_mosaic.version = 11 : i64} {
  func.func @_probe(%arg0: i32, %arg1: memref<8x128xf32, #tpu.memory_space<vmem>>, %arg2: memref<8x128xf32, #tpu.memory_space<vmem>>) attributes {dimension_semantics = [#tpu.dimension_semantics<arbitrary>], iteration_bounds = array<i64: 2>, scalar_prefetch = 0 : i64, scratch_operands = 0 : i64, tpu.core_type = #tpu.core_type<tc>, window_params = [{pipeline_mode = #tpu.pipeline_mode<synchronous>, transform_indices = @transform_0, window_bounds = array<i64: 8, 128>}, {pipeline_mode = #tpu.pipeline_mode<synchronous>, transform_indices = @transform_1, window_bounds = array<i64: 8, 128>}]} {
    %c0 = arith.constant 0 : index
    %c0_0 = arith.constant 0 : index
    %0 = vector.load %arg1[%c0, %c0_0] : memref<8x128xf32, #tpu.memory_space<vmem>>, vector<8x128xf32>
    %cst = arith.constant 1.000000e+00 : f32
    %1 = vector.broadcast %cst : f32 to vector<8x128xf32>
    %2 = arith.addf %0, %1 : vector<8x128xf32>
    %c0_1 = arith.constant 0 : index
    %c0_2 = arith.constant 0 : index
    %3 = vector.load %arg2[%c0_1, %c0_2] : memref<8x128xf32, #tpu.memory_space<vmem>>, vector<8x128xf32>
    tpu.vector_store %arg2[%c0_1, %c0_2], %2 {strides = array<i32>} : memref<8x128xf32, #tpu.memory_space<vmem>>, vector<8x128xf32>,
    return
  }
  func.func @transform_0(%arg0: i32) -> (i32, i32) {
    %c0_i32 = arith.constant 0 : i32
    %c0_i32_0 = arith.constant 0 : i32
    %c0_i32_1 = arith.constant 0 : i32
    return %c0_i32, %c0_i32_0 : i32, i32
  }
  func.func @transform_1(%arg0: i32) -> (i32, i32) {
    %c0_i32 = arith.constant 0 : i32
    %c0_i32_0 = arith.constant 0 : i32
    %c0_i32_1 = arith.constant 0 : i32
    return %c0_i32, %c0_i32_0 : i32, i32
  }
}

module attributes {stable_mosaic.version = 11 : i64} {
  func.func @_mlp_kernel(%arg0: i32, %arg1: i32, %arg2: memref<16x128xf32, #tpu.memory_space<vmem>>, %arg3: memref<1x128xf32, #tpu.memory_space<vmem>>, %arg4: memref<1x128xf32, #tpu.memory_space<vmem>>, %arg5: memref<128x128xbf16, #tpu.memory_space<vmem>>, %arg6: memref<1x128xf32, #tpu.memory_space<vmem>>, %arg7: memref<128x128xbf16, #tpu.memory_space<vmem>>, %arg8: memref<1x128xf32, #tpu.memory_space<vmem>>, %arg9: memref<1x128xf32, #tpu.memory_space<vmem>>, %arg10: memref<1x128xf32, #tpu.memory_space<vmem>>, %arg11: memref<128x128xbf16, #tpu.memory_space<vmem>>, %arg12: memref<1x128xf32, #tpu.memory_space<vmem>>, %arg13: memref<16x128xf32, #tpu.memory_space<vmem>>, %arg14: memref<16x128xbf16, #tpu.memory_space<vmem>>, %arg15: memref<16x128xf32, #tpu.memory_space<vmem>>) attributes {dimension_semantics = [#tpu.dimension_semantics<parallel>, #tpu.dimension_semantics<arbitrary>], iteration_bounds = array<i64: 1, 1>, scalar_prefetch = 0 : i64, scratch_operands = 2 : i64, tpu.core_type = #tpu.core_type<tc>, window_params = [{transform_indices = @transform_0, window_bounds = array<i64: 16, 128>}, {pipeline_mode = #tpu.pipeline_mode<synchronous>, transform_indices = @transform_1, window_bounds = array<i64: 1, 128>}, {pipeline_mode = #tpu.pipeline_mode<synchronous>, transform_indices = @transform_2, window_bounds = array<i64: 1, 128>}, {transform_indices = @transform_3, window_bounds = array<i64: 128, 128>}, {transform_indices = @transform_4, window_bounds = array<i64: 1, 128>}, {transform_indices = @transform_5, window_bounds = array<i64: 128, 128>}, {pipeline_mode = #tpu.pipeline_mode<synchronous>, transform_indices = @transform_6, window_bounds = array<i64: 1, 128>}, {pipeline_mode = #tpu.pipeline_mode<synchronous>, transform_indices = @transform_7, window_bounds = array<i64: 1, 128>}, {pipeline_mode = #tpu.pipeline_mode<synchronous>, transform_indices = @transform_8, window_bounds = array<i64: 1, 128>}, {pipeline_mode = #tpu.pipeline_mode<synchronous>, transform_indices = @transform_9, window_bounds = array<i64: 128, 128>}, {pipeline_mode = #tpu.pipeline_mode<synchronous>, transform_indices = @transform_10, window_bounds = array<i64: 1, 128>}, {transform_indices = @transform_11, window_bounds = array<i64: 16, 128>}]} {
    %c0_i32 = arith.constant 0 : i32
    %0 = arith.cmpi eq, %arg1, %c0_i32 : i32
    %1 = arith.extui %0 : i1 to i32
    %c0_i32_0 = arith.constant 0 : i32
    %2 = arith.cmpi ne, %1, %c0_i32_0 : i32
    scf.if %2 {
      %c0_18 = arith.constant 0 : index
      %c0_19 = arith.constant 0 : index
      %26 = vector.load %arg2[%c0_18, %c0_19] : memref<16x128xf32, #tpu.memory_space<vmem>>, vector<16x128xf32>
      %cst_20 = arith.constant dense<0.000000e+00> : vector<16xf32>
      %27 = vector.multi_reduction <add>, %26, %cst_20 [1] : vector<16x128xf32> to vector<16xf32>
      %28 = vector.shape_cast %27 : vector<16xf32> to vector<16x1xf32>
      %29 = arith.mulf %26, %26 : vector<16x128xf32>
      %cst_21 = arith.constant dense<0.000000e+00> : vector<16xf32>
      %30 = vector.multi_reduction <add>, %29, %cst_21 [1] : vector<16x128xf32> to vector<16xf32>
      %31 = vector.shape_cast %30 : vector<16xf32> to vector<16x1xf32>
      %cst_22 = arith.constant 3.125000e-02 : f32
      %32 = vector.broadcast %cst_22 : f32 to vector<16x1xf32>
      %33 = arith.mulf %28, %32 : vector<16x1xf32>
      %cst_23 = arith.constant 3.125000e-02 : f32
      %34 = vector.broadcast %cst_23 : f32 to vector<16x1xf32>
      %35 = arith.mulf %31, %34 : vector<16x1xf32>
      %36 = arith.mulf %33, %33 : vector<16x1xf32>
      %37 = arith.subf %35, %36 : vector<16x1xf32>
      %cst_24 = arith.constant 0.000000e+00 : f32
      %38 = vector.broadcast %cst_24 : f32 to vector<16x1xf32>
      %39 = arith.maximumf %37, %38 : vector<16x1xf32>
      %40 = vector.broadcast %33 : vector<16x1xf32> to vector<16x128xf32>
      %41 = arith.subf %26, %40 : vector<16x128xf32>
      %cst_25 = arith.constant 9.99999974E-6 : f32
      %42 = vector.broadcast %cst_25 : f32 to vector<16x1xf32>
      %43 = arith.addf %39, %42 : vector<16x1xf32>
      %44 = math.rsqrt %43 : vector<16x1xf32>
      %45 = vector.broadcast %44 : vector<16x1xf32> to vector<16x128xf32>
      %46 = arith.mulf %41, %45 : vector<16x128xf32>
      %c0_26 = arith.constant 0 : index
      %c0_27 = arith.constant 0 : index
      %47 = vector.load %arg3[%c0_26, %c0_27] : memref<1x128xf32, #tpu.memory_space<vmem>>, vector<1x128xf32>
      %48 = vector.broadcast %47 : vector<1x128xf32> to vector<16x128xf32>
      %49 = arith.mulf %46, %48 : vector<16x128xf32>
      %c0_28 = arith.constant 0 : index
      %c0_29 = arith.constant 0 : index
      %50 = vector.load %arg4[%c0_28, %c0_29] : memref<1x128xf32, #tpu.memory_space<vmem>>, vector<1x128xf32>
      %51 = vector.broadcast %50 : vector<1x128xf32> to vector<16x128xf32>
      %52 = arith.addf %49, %51 : vector<16x128xf32>
      %53 = arith.truncf %52 : vector<16x128xf32> to vector<16x128xbf16>
      %c0_30 = arith.constant 0 : index
      %c0_31 = arith.constant 0 : index
      %54 = vector.load %arg14[%c0_30, %c0_31] : memref<16x128xbf16, #tpu.memory_space<vmem>>, vector<16x128xbf16>
      tpu.vector_store %arg14[%c0_30, %c0_31], %53 {strides = array<i32>} : memref<16x128xbf16, #tpu.memory_space<vmem>>, vector<16x128xbf16>,
      %cst_32 = arith.constant 0.000000e+00 : f32
      %55 = vector.broadcast %cst_32 : f32 to vector<16x128xf32>
      %c0_33 = arith.constant 0 : index
      %c0_34 = arith.constant 0 : index
      %56 = vector.load %arg15[%c0_33, %c0_34] : memref<16x128xf32, #tpu.memory_space<vmem>>, vector<16x128xf32>
      tpu.vector_store %arg15[%c0_33, %c0_34], %55 {strides = array<i32>} : memref<16x128xf32, #tpu.memory_space<vmem>>, vector<16x128xf32>,
    } else {
    }
    %c0 = arith.constant 0 : index
    %c0_1 = arith.constant 0 : index
    %3 = vector.load %arg14[%c0, %c0_1] : memref<16x128xbf16, #tpu.memory_space<vmem>>, vector<16x128xbf16>
    %c0_2 = arith.constant 0 : index
    %c0_3 = arith.constant 0 : index
    %4 = vector.load %arg5[%c0_2, %c0_3] : memref<128x128xbf16, #tpu.memory_space<vmem>>, vector<128x128xbf16>
    %cst = arith.constant dense<0.000000e+00> : vector<16x128xf32>
    %5 = tpu.matmul %3, %4, %cst {dimension_numbers = #tpu.dot_dimension_numbers<[1], [0], [0], [1], [0, 0, 1, 1], [], []>} : vector<16x128xbf16>, vector<128x128xbf16>, vector<16x128xf32> -> vector<16x128xf32>
    %c0_4 = arith.constant 0 : index
    %c0_5 = arith.constant 0 : index
    %6 = vector.load %arg6[%c0_4, %c0_5] : memref<1x128xf32, #tpu.memory_space<vmem>>, vector<1x128xf32>
    %7 = vector.broadcast %6 : vector<1x128xf32> to vector<16x128xf32>
    %8 = arith.addf %5, %7 : vector<16x128xf32>
    %cst_6 = arith.constant 5.000000e-01 : f32
    %9 = vector.broadcast %cst_6 : f32 to vector<16x128xf32>
    %10 = arith.mulf %9, %8 : vector<16x128xf32>
    %cst_7 = arith.constant 0.707106769 : f32
    %11 = vector.broadcast %cst_7 : f32 to vector<16x128xf32>
    %12 = arith.mulf %8, %11 : vector<16x128xf32>
    %13 = math.erf %12 : vector<16x128xf32>
    %cst_8 = arith.constant 1.000000e+00 : f32
    %14 = vector.broadcast %cst_8 : f32 to vector<16x128xf32>
    %15 = arith.addf %14, %13 : vector<16x128xf32>
    %16 = arith.mulf %10, %15 : vector<16x128xf32>
    %c0_9 = arith.constant 0 : index
    %c0_10 = arith.constant 0 : index
    %17 = vector.load %arg15[%c0_9, %c0_10] : memref<16x128xf32, #tpu.memory_space<vmem>>, vector<16x128xf32>
    %18 = arith.truncf %16 : vector<16x128xf32> to vector<16x128xbf16>
    %c0_11 = arith.constant 0 : index
    %c0_12 = arith.constant 0 : index
    %19 = vector.load %arg7[%c0_11, %c0_12] : memref<128x128xbf16, #tpu.memory_space<vmem>>, vector<128x128xbf16>
    %cst_13 = arith.constant dense<0.000000e+00> : vector<16x128xf32>
    %20 = tpu.matmul %18, %19, %cst_13 {dimension_numbers = #tpu.dot_dimension_numbers<[1], [0], [0], [1], [0, 0, 1, 1], [], []>} : vector<16x128xbf16>, vector<128x128xbf16>, vector<16x128xf32> -> vector<16x128xf32>
    %21 = arith.addf %17, %20 : vector<16x128xf32>
    %c0_14 = arith.constant 0 : index
    %c0_15 = arith.constant 0 : index
    %22 = vector.load %arg15[%c0_14, %c0_15] : memref<16x128xf32, #tpu.memory_space<vmem>>, vector<16x128xf32>
    tpu.vector_store %arg15[%c0_14, %c0_15], %21 {strides = array<i32>} : memref<16x128xf32, #tpu.memory_space<vmem>>, vector<16x128xf32>,
    %c0_i32_16 = arith.constant 0 : i32
    %23 = arith.cmpi eq, %arg1, %c0_i32_16 : i32
    %24 = arith.extui %23 : i1 to i32
    %c0_i32_17 = arith.constant 0 : i32
    %25 = arith.cmpi ne, %24, %c0_i32_17 : i32
    scf.if %25 {
      %c0_18 = arith.constant 0 : index
      %c0_19 = arith.constant 0 : index
      %26 = vector.load %arg2[%c0_18, %c0_19] : memref<16x128xf32, #tpu.memory_space<vmem>>, vector<16x128xf32>
      %c0_20 = arith.constant 0 : index
      %c0_21 = arith.constant 0 : index
      %27 = vector.load %arg15[%c0_20, %c0_21] : memref<16x128xf32, #tpu.memory_space<vmem>>, vector<16x128xf32>
      %28 = arith.addf %26, %27 : vector<16x128xf32>
      %c0_22 = arith.constant 0 : index
      %c0_23 = arith.constant 0 : index
      %29 = vector.load %arg8[%c0_22, %c0_23] : memref<1x128xf32, #tpu.memory_space<vmem>>, vector<1x128xf32>
      %30 = vector.broadcast %29 : vector<1x128xf32> to vector<16x128xf32>
      %31 = arith.addf %28, %30 : vector<16x128xf32>
      %cst_24 = arith.constant dense<0.000000e+00> : vector<16xf32>
      %32 = vector.multi_reduction <add>, %31, %cst_24 [1] : vector<16x128xf32> to vector<16xf32>
      %33 = vector.shape_cast %32 : vector<16xf32> to vector<16x1xf32>
      %34 = arith.mulf %31, %31 : vector<16x128xf32>
      %cst_25 = arith.constant dense<0.000000e+00> : vector<16xf32>
      %35 = vector.multi_reduction <add>, %34, %cst_25 [1] : vector<16x128xf32> to vector<16xf32>
      %36 = vector.shape_cast %35 : vector<16xf32> to vector<16x1xf32>
      %cst_26 = arith.constant 3.125000e-02 : f32
      %37 = vector.broadcast %cst_26 : f32 to vector<16x1xf32>
      %38 = arith.mulf %33, %37 : vector<16x1xf32>
      %cst_27 = arith.constant 3.125000e-02 : f32
      %39 = vector.broadcast %cst_27 : f32 to vector<16x1xf32>
      %40 = arith.mulf %36, %39 : vector<16x1xf32>
      %41 = arith.mulf %38, %38 : vector<16x1xf32>
      %42 = arith.subf %40, %41 : vector<16x1xf32>
      %cst_28 = arith.constant 0.000000e+00 : f32
      %43 = vector.broadcast %cst_28 : f32 to vector<16x1xf32>
      %44 = arith.maximumf %42, %43 : vector<16x1xf32>
      %45 = vector.broadcast %38 : vector<16x1xf32> to vector<16x128xf32>
      %46 = arith.subf %31, %45 : vector<16x128xf32>
      %cst_29 = arith.constant 9.99999974E-6 : f32
      %47 = vector.broadcast %cst_29 : f32 to vector<16x1xf32>
      %48 = arith.addf %44, %47 : vector<16x1xf32>
      %49 = math.rsqrt %48 : vector<16x1xf32>
      %50 = vector.broadcast %49 : vector<16x1xf32> to vector<16x128xf32>
      %51 = arith.mulf %46, %50 : vector<16x128xf32>
      %c0_30 = arith.constant 0 : index
      %c0_31 = arith.constant 0 : index
      %52 = vector.load %arg9[%c0_30, %c0_31] : memref<1x128xf32, #tpu.memory_space<vmem>>, vector<1x128xf32>
      %53 = vector.broadcast %52 : vector<1x128xf32> to vector<16x128xf32>
      %54 = arith.mulf %51, %53 : vector<16x128xf32>
      %c0_32 = arith.constant 0 : index
      %c0_33 = arith.constant 0 : index
      %55 = vector.load %arg10[%c0_32, %c0_33] : memref<1x128xf32, #tpu.memory_space<vmem>>, vector<1x128xf32>
      %56 = vector.broadcast %55 : vector<1x128xf32> to vector<16x128xf32>
      %57 = arith.addf %54, %56 : vector<16x128xf32>
      %58 = arith.truncf %57 : vector<16x128xf32> to vector<16x128xbf16>
      %c0_34 = arith.constant 0 : index
      %c0_35 = arith.constant 0 : index
      %59 = vector.load %arg11[%c0_34, %c0_35] : memref<128x128xbf16, #tpu.memory_space<vmem>>, vector<128x128xbf16>
      %cst_36 = arith.constant dense<0.000000e+00> : vector<16x128xf32>
      %60 = tpu.matmul %58, %59, %cst_36 {dimension_numbers = #tpu.dot_dimension_numbers<[1], [0], [0], [1], [0, 0, 1, 1], [], []>} : vector<16x128xbf16>, vector<128x128xbf16>, vector<16x128xf32> -> vector<16x128xf32>
      %c0_37 = arith.constant 0 : index
      %c0_38 = arith.constant 0 : index
      %61 = vector.load %arg12[%c0_37, %c0_38] : memref<1x128xf32, #tpu.memory_space<vmem>>, vector<1x128xf32>
      %62 = vector.broadcast %61 : vector<1x128xf32> to vector<16x128xf32>
      %63 = arith.addf %60, %62 : vector<16x128xf32>
      %c0_39 = arith.constant 0 : index
      %c0_40 = arith.constant 0 : index
      %64 = vector.load %arg13[%c0_39, %c0_40] : memref<16x128xf32, #tpu.memory_space<vmem>>, vector<16x128xf32>
      tpu.vector_store %arg13[%c0_39, %c0_40], %63 {strides = array<i32>} : memref<16x128xf32, #tpu.memory_space<vmem>>, vector<16x128xf32>,
    } else {
    }
    return
  }
  func.func @transform_0(%arg0: i32, %arg1: i32) -> (i32, i32) {
    %c0_i32 = arith.constant 0 : i32
    %c0_i32_0 = arith.constant 0 : i32
    return %arg0, %c0_i32 : i32, i32
  }
  func.func @transform_1(%arg0: i32, %arg1: i32) -> (i32, i32) {
    %c0_i32 = arith.constant 0 : i32
    %c0_i32_0 = arith.constant 0 : i32
    %c0_i32_1 = arith.constant 0 : i32
    return %c0_i32, %c0_i32_0 : i32, i32
  }
  func.func @transform_2(%arg0: i32, %arg1: i32) -> (i32, i32) {
    %c0_i32 = arith.constant 0 : i32
    %c0_i32_0 = arith.constant 0 : i32
    %c0_i32_1 = arith.constant 0 : i32
    return %c0_i32, %c0_i32_0 : i32, i32
  }
  func.func @transform_3(%arg0: i32, %arg1: i32) -> (i32, i32) {
    %c0_i32 = arith.constant 0 : i32
    %c0_i32_0 = arith.constant 0 : i32
    return %c0_i32, %arg1 : i32, i32
  }
  func.func @transform_4(%arg0: i32, %arg1: i32) -> (i32, i32) {
    %c0_i32 = arith.constant 0 : i32
    %c0_i32_0 = arith.constant 0 : i32
    return %c0_i32, %arg1 : i32, i32
  }
  func.func @transform_5(%arg0: i32, %arg1: i32) -> (i32, i32) {
    %c0_i32 = arith.constant 0 : i32
    %c0_i32_0 = arith.constant 0 : i32
    return %arg1, %c0_i32 : i32, i32
  }
  func.func @transform_6(%arg0: i32, %arg1: i32) -> (i32, i32) {
    %c0_i32 = arith.constant 0 : i32
    %c0_i32_0 = arith.constant 0 : i32
    %c0_i32_1 = arith.constant 0 : i32
    return %c0_i32, %c0_i32_0 : i32, i32
  }
  func.func @transform_7(%arg0: i32, %arg1: i32) -> (i32, i32) {
    %c0_i32 = arith.constant 0 : i32
    %c0_i32_0 = arith.constant 0 : i32
    %c0_i32_1 = arith.constant 0 : i32
    return %c0_i32, %c0_i32_0 : i32, i32
  }
  func.func @transform_8(%arg0: i32, %arg1: i32) -> (i32, i32) {
    %c0_i32 = arith.constant 0 : i32
    %c0_i32_0 = arith.constant 0 : i32
    %c0_i32_1 = arith.constant 0 : i32
    return %c0_i32, %c0_i32_0 : i32, i32
  }
  func.func @transform_9(%arg0: i32, %arg1: i32) -> (i32, i32) {
    %c0_i32 = arith.constant 0 : i32
    %c0_i32_0 = arith.constant 0 : i32
    %c0_i32_1 = arith.constant 0 : i32
    return %c0_i32, %c0_i32_0 : i32, i32
  }
  func.func @transform_10(%arg0: i32, %arg1: i32) -> (i32, i32) {
    %c0_i32 = arith.constant 0 : i32
    %c0_i32_0 = arith.constant 0 : i32
    %c0_i32_1 = arith.constant 0 : i32
    return %c0_i32, %c0_i32_0 : i32, i32
  }
  func.func @transform_11(%arg0: i32, %arg1: i32) -> (i32, i32) {
    %c0_i32 = arith.constant 0 : i32
    %c0_i32_0 = arith.constant 0 : i32
    return %arg0, %c0_i32 : i32, i32
  }
}

</mosaic_0001>

<llo_original>
// kernel: tpu_custom_call.1
$region0: #{tpu_custom_call.1}
  #allocation0 [shape = 'u32[]', space=smem, size = 0x4, offset = 0x4, fixed_abs, tag = 'smem constant byte address 0x4 - core index']
  #allocation1 [shape = 'u32[144,128]{1,0:T(1,128)}', space=vmem, size = 0x12000, scoped, tag = 'internal scratch']
  %s0 = inlined_call_operand.hbm [shape: f32[8,128], index: 0, kind: input, shape index: {}]
  %s1 = inlined_call_operand.hbm [shape: f32[8,128], index: 1, kind: output, shape index: {}]
  %s2 = sld [smem:[#allocation0]]
  $region41: #{tpu_custom_call.1} parent=0
    _
  %s4 = ssub.s32 1, %s2
  %s5 = scalar_select 0, %s4, %s2
  $region1: #{tpu_custom_call.1} parent=0
    #allocation2 [shape = 'u8[4096]{0}', space=vmem, size = 0x1000, scoped, tag = 'input window, operand 0, single buffered']
    #allocation3 [shape = 's32[2]{0}', space=sflag, size = 0x8, scoped, tag = 'scoped memory for tpu_custom_call.1']
    #allocation4 [shape = 's32[2]{0}', space=sflag, size = 0x8, scoped, tag = 'scoped memory for tpu_custom_call.1']
    #allocation5 [shape = 'u8[4096]{0}', space=vmem, size = 0x1000, scoped, tag = 'output window, operand 0, single buffered']
    %6 = vsyncpa [#allocation3], 0
    %7 = vsyncpa [#allocation4], 0
    loop: start=0, step=1, limit=4
    $region2: #{tpu_custom_call.1} parent=1 // loop_pre_header
      _
    $region3: #{tpu_custom_call.1} parent=1 // loop_header
      %s9 = sphi 0, %s13
      %p10 = scmp.ge.s32.totalorder %s9, 4
      %s17 = sphi 0, %s17
      %s19 = sphi 0, %s17
      %s20 = sphi 0, %s19
      %s34 = sphi 0, %s20
      %s38 = sphi 0, %s38
      %s40 = sphi 0, %s38
      %s41 = sphi 0, %s40
      %s55 = sphi 0, %s41
    $region4: #{tpu_custom_call.1} parent=1 // loop_header_branch
      %12 = sbr.rel (%p10) target = $region8
    $region5: #{tpu_custom_call.1} parent=1 // loop_body
      %s14 = ssub.s32 %s9, 1
      %s15 = ssub.s32 %s9, 2
      %s16 = sadd.s32 %s9, 1
      %s18 = sadd.s32 %s17, 1
      %p21 = scmp.eq.s32.totalorder %s9, 1
      %p22 = scmp.ne.s32.totalorder %s17, %s19
      %p23 = scmp.eq.s32.totalorder %s9, 0
      %p24 = por %p22, %p23
      %p25 = scmp.ne.s32.totalorder %s17, %s19
      %p26 = scmp.eq.s32.totalorder %s14, 1
      %p27 = por %p25, %p26
      %p28 = scmp.ne.s32.totalorder %s19, %s20
      %p29 = scmp.eq.s32.totalorder %s14, 0
      %p30 = por %p28, %p29
      %p31 = scmp.ne.s32.totalorder %s19, %s20
      %p32 = scmp.eq.s32.totalorder %s15, 1
      %p33 = por %p31, %p32
      %p35 = scmp.ne.s32.totalorder %s20, %s34
      %p36 = scmp.eq.s32.totalorder %s15, 0
      %p37 = por %p35, %p36
      %s39 = sadd.s32 %s38, 1
      %p42 = scmp.eq.s32.totalorder %s9, 1
      %p43 = scmp.ne.s32.totalorder %s38, %s40
      %p44 = scmp.eq.s32.totalorder %s9, 0
      %p45 = por %p43, %p44
      %p46 = scmp.ne.s32.totalorder %s38, %s40
      %p47 = scmp.eq.s32.totalorder %s14, 1
      %p48 = por %p46, %p47
      %p49 = scmp.ne.s32.totalorder %s40, %s41
      %p50 = scmp.eq.s32.totalorder %s14, 0
      %p51 = por %p49, %p50
      %p52 = scmp.ne.s32.totalorder %s40, %s41
      %p53 = scmp.eq.s32.totalorder %s15, 1
      %p54 = por %p52, %p53
      %p56 = scmp.ne.s32.totalorder %s41, %s55
      %p57 = scmp.eq.s32.totalorder %s15, 0
      %p58 = por %p56, %p57
      %p59 = scmp.le.s32.totalorder 1, %s9
      %p60 = scmp.lt.s32.totalorder %s9, 3
      %p61 = pnand %p59, %p60
      %p62 = pneg %p61
      // Predicated region
      $region9: #{tpu_custom_call.1} parent=5 // pred_check
        _
      $region10: #{tpu_custom_call.1} parent=5 // pred_check_branch
        %64 = sbr.rel (%p61) target = $region12
      $region11: #{tpu_custom_call.1} parent=5 // pred_region
        %s65 = ssub.s32 %s9, 1
        // Predicated region
        $region13: #{tpu_custom_call.1} parent=11 // pred_check
          %p66 = pneg %p30
        $region14: #{tpu_custom_call.1} parent=11 // pred_check_branch
          %68 = sbr.rel (%p66) target = $region16
        $region15: #{tpu_custom_call.1} parent=11 // pred_region
          %s70 = ssub.s32 128, 128
          %71 = vsyncadd [#allocation3], %s70
          %s73 = sshll.u32 [#allocation2], 4
          %s74 = int_to_ptr.vmem [resolvable:$true] %s73
          %76 = dma.hbm_to_vmem [thread:$0]  %s0, 128, %s74, [#allocation3]
        $region16: #{tpu_custom_call.1} parent=11 // pred_fallthru
          _
      $region12: #{tpu_custom_call.1} parent=5 // pred_fallthru
        _
      %p77 = scmp.lt.s32.totalorder %s9, 2
      // Predicated region
      $region17: #{tpu_custom_call.1} parent=5 // pred_check
        %p78 = pneg %p77
      $region18: #{tpu_custom_call.1} parent=5 // pred_check_branch
        %80 = sbr.rel (%p78) target = $region20
      $region19: #{tpu_custom_call.1} parent=5 // pred_region
        _
      $region20: #{tpu_custom_call.1} parent=5 // pred_fallthru
        _
      %p81 = scmp.le.s32.totalorder 1, %s9
      %p82 = scmp.lt.s32.totalorder %s9, 3
      %p83 = pnand %p81, %p82
      %p84 = pneg %p83
      // Predicated region
      $region21: #{tpu_custom_call.1} parent=5 // pred_check
        _
      $region22: #{tpu_custom_call.1} parent=5 // pred_check_branch
        %86 = sbr.rel (%p83) target = $region24
      $region23: #{tpu_custom_call.1} parent=5 // pred_region
        %s87 = ssub.s32 %s9, 1
        // Predicated region
        $region25: #{tpu_custom_call.1} parent=23 // pred_check
          %p88 = pneg %p30
        $region26: #{tpu_custom_call.1} parent=23 // pred_check_branch
          %90 = sbr.rel (%p88) target = $region28
        $region27: #{tpu_custom_call.1} parent=23 // pred_region
          %91 = dma.done [#allocation3], 128
        $region28: #{tpu_custom_call.1} parent=23 // pred_fallthru
          _
        %p92 = pneg %p30
        %p93 = pneg %p27
        %p94 = pneg %p51
        %p95 = pneg %p48
        %v96 = vld [vmem:[#allocation2] sm:$0xff]
        %v97 = vadd.f32 %v96, 1.0
        %98 = vst [vmem:[#allocation5] sm:$0xff] %v97
        // Predicated region
        $region29: #{tpu_custom_call.1} parent=23 // pred_check
          %p99 = pneg %p48
        $region30: #{tpu_custom_call.1} parent=23 // pred_check_branch
          %101 = sbr.rel (%p99) target = $region32
        $region31: #{tpu_custom_call.1} parent=23 // pred_region
          %s103 = ssub.s32 128, 128
          %104 = vsyncadd [#allocation4], %s103
          %s106 = sshll.u32 [#allocation5], 4
          %s107 = int_to_ptr.vmem [resolvable:$true] %s106
          %109 = dma.vmem_to_hbm [thread:$0]  %s107, 128, %s1, [#allocation4]
        $region32: #{tpu_custom_call.1} parent=23 // pred_fallthru
          _
        // Predicated region
        $region33: #{tpu_custom_call.1} parent=23 // pred_check
          %p110 = pneg %p48
        $region34: #{tpu_custom_call.1} parent=23 // pred_check_branch
          %112 = sbr.rel (%p110) target = $region36
        $region35: #{tpu_custom_call.1} parent=23 // pred_region
          %113 = dma.done [#allocation4], 128
        $region36: #{tpu_custom_call.1} parent=23 // pred_fallthru
          _
      $region24: #{tpu_custom_call.1} parent=5 // pred_fallthru
        _
      %p114 = scmp.le.s32.totalorder 2, %s9
      // Predicated region
      $region37: #{tpu_custom_call.1} parent=5 // pred_check
        %p115 = pneg %p114
      $region38: #{tpu_custom_call.1} parent=5 // pred_check_branch
        %117 = sbr.rel (%p115) target = $region40
      $region39: #{tpu_custom_call.1} parent=5 // pred_region
        %s118 = ssub.s32 %s9, 2
      $region40: #{tpu_custom_call.1} parent=5 // pred_fallthru
        _
    $region6: #{tpu_custom_call.1} parent=1 // loop_footer
      %s13 = sadd.s32 1, %s9
    $region7: #{tpu_custom_call.1} parent=1 // loop_footer_branch
      %8 = sbr.rel target = $region3
    $region8: #{tpu_custom_call.1} parent=1 // loop_exit
      _
    %119 = vsyncpa [#allocation3], 1
    %s120 = scalar_lea.sflag [#allocation3], 1
    %121 = vsyncpa %s120, 1
    %122 = vsyncpa [#allocation4], 1
    %s123 = scalar_lea.sflag [#allocation4], 1
    %124 = vsyncpa %s123, 1

// kernel: tpu_custom_call.1
$region0: #{tpu_custom_call.1}
  #allocation0 [shape = 'u32[]', space=smem, size = 0x4, offset = 0x4, fixed_abs, tag = 'smem constant byte address 0x4 - core index']
  #allocation1 [shape = 'u32[144,128]{1,0:T(1,128)}', space=vmem, size = 0x12000, scoped, tag = 'internal scratch']
  #allocation2 [shape = 'bf16[16,128]{1,0:T(16,128)(2,1)}', space=vmem, size = 0x1000, scoped, tag = 'scratch operand']
  #allocation3 [shape = 'f32[16,128]{1,0:T(8,128)}', space=vmem, size = 0x2000, scoped, tag = 'scratch operand']
  %s0 = inlined_call_operand.hbm [shape: f32[16,128], index: 0, kind: input, shape index: {}]
  %s1 = inlined_call_operand.hbm [shape: f32[1,128], index: 1, kind: input, shape index: {}]
  %s2 = inlined_call_operand.hbm [shape: f32[1,128], index: 2, kind: input, shape index: {}]
  %s3 = inlined_call_operand.hbm [shape: bf16[128,128], index: 3, kind: input, shape index: {}]
  %s4 = inlined_call_operand.hbm [shape: f32[1,128], index: 4, kind: input, shape index: {}]
  %s5 = inlined_call_operand.hbm [shape: bf16[128,128], index: 5, kind: input, shape index: {}]
  %s6 = inlined_call_operand.hbm [shape: f32[1,128], index: 6, kind: input, shape index: {}]
  %s7 = inlined_call_operand.hbm [shape: f32[1,128], index: 7, kind: input, shape index: {}]
  %s8 = inlined_call_operand.hbm [shape: f32[1,128], index: 8, kind: input, shape index: {}]
  %s9 = inlined_call_operand.hbm [shape: bf16[128,128], index: 9, kind: input, shape index: {}]
  %s10 = inlined_call_operand.hbm [shape: f32[1,128], index: 10, kind: input, shape index: {}]
  %s11 = inlined_call_operand.hbm [shape: f32[16,128], index: 11, kind: output, shape index: {}]
  %s12 = sld [smem:[#allocation0]]
  $region106: #{tpu_custom_call.1} parent=0
    _
  %s14 = ssub.s32 1, %s12
  %s15 = scalar_select 0, %s14, %s12
  $region1: #{tpu_custom_call.1} parent=0
    #allocation4 [shape = 'u8[8192]{0}', space=vmem, size = 0x2000, scoped, tag = 'input window, operand 0, single buffered']
    #allocation5 [shape = 's32[1]{0}', space=sflag, size = 0x4, scoped, tag = 'scoped memory for tpu_custom_call.1']
    #allocation6 [shape = 's32[1]{0}', space=sflag, size = 0x4, scoped, tag = 'scoped memory for tpu_custom_call.1']
    #allocation7 [shape = 'u8[512]{0}', space=vmem, size = 0x400, scoped, tag = 'input window, operand 1, single buffered']
    #allocation8 [shape = 's32[1]{0}', space=sflag, size = 0x4, scoped, tag = 'scoped memory for tpu_custom_call.1']
    #allocation9 [shape = 'u8[512]{0}', space=vmem, size = 0x400, scoped, tag = 'input window, operand 2, single buffered']
    #allocation10 [shape = 'u8[32768]{0}', space=vmem, size = 0x8000, scoped, tag = 'input window, operand 3, single buffered']
    #allocation11 [shape = 's32[1]{0}', space=sflag, size = 0x4, scoped, tag = 'scoped memory for tpu_custom_call.1']
    #allocation12 [shape = 'u8[512]{0}', space=vmem, size = 0x400, scoped, tag = 'input window, operand 4, single buffered']
    #allocation13 [shape = 'u8[32768]{0}', space=vmem, size = 0x8000, scoped, tag = 'input window, operand 5, single buffered']
    #allocation14 [shape = 's32[1]{0}', space=sflag, size = 0x4, scoped, tag = 'scoped memory for tpu_custom_call.1']
    #allocation15 [shape = 'u8[512]{0}', space=vmem, size = 0x400, scoped, tag = 'input window, operand 6, single buffered']
    #allocation16 [shape = 'u8[512]{0}', space=vmem, size = 0x400, scoped, tag = 'input window, operand 7, single buffered']
    #allocation17 [shape = 's32[1]{0}', space=sflag, size = 0x4, scoped, tag = 'scoped memory for tpu_custom_call.1']
    #allocation18 [shape = 'u8[512]{0}', space=vmem, size = 0x400, scoped, tag = 'input window, operand 8, single buffered']
    #allocation19 [shape = 'u8[32768]{0}', space=vmem, size = 0x8000, scoped, tag = 'input window, operand 9, single buffered']
    #allocation20 [shape = 's32[1]{0}', space=sflag, size = 0x4, scoped, tag = 'scoped memory for tpu_custom_call.1']
    #allocation21 [shape = 'u8[512]{0}', space=vmem, size = 0x400, scoped, tag = 'input window, operand 10, single buffered']
    #allocation22 [shape = 'u8[8192]{0}', space=vmem, size = 0x2000, scoped, tag = 'output window, operand 0, single buffered']
    %16 = vsyncpa [#allocation5], 0
    %17 = vsyncpa [#allocation8], 0
    %18 = vsyncpa [#allocation11], 0
    %19 = vsyncpa [#allocation14], 0
    %20 = vsyncpa [#allocation17], 0
    %21 = vsyncpa [#allocation20], 0
    %22 = vsyncpa [#allocation6], 0
    // Predicated region
    $region2: #{tpu_custom_call.1} parent=1 // pred_check
      _
    $region3: #{tpu_custom_call.1} parent=1 // pred_check_branch
      %24 = sbr.rel (0) target = $region5
    $region4: #{tpu_custom_call.1} parent=1 // pred_region
      %s26 = ssub.s32 256, 256
      %27 = vsyncadd [#allocation5], %s26
      %s28 = sshll.u32 [#allocation4], 4
      %s29 = int_to_ptr.vmem [resolvable:$true] %s28
      %34 = dma.hbm_to_vmem [thread:$0]  %s0, 256, %s29, [#allocation5], 128, 128, 8
    $region5: #{tpu_custom_call.1} parent=1 // pred_fallthru
      _
    // Predicated region
    $region6: #{tpu_custom_call.1} parent=1 // pred_check
      _
    $region7: #{tpu_custom_call.1} parent=1 // pred_check_branch
      %36 = sbr.rel (0) target = $region9
    $region8: #{tpu_custom_call.1} parent=1 // pred_region
      %s38 = ssub.s32 16, 16
      %39 = vsyncadd [#allocation8], %s38
      %s41 = sshll.u32 [#allocation7], 4
      %s42 = int_to_ptr.vmem [resolvable:$true] %s41
      %44 = dma.hbm_to_vmem [thread:$0]  %s1, 16, %s42, [#allocation8]
    $region9: #{tpu_custom_call.1} parent=1 // pred_fallthru
      _
    // Predicated region
    $region10: #{tpu_custom_call.1} parent=1 // pred_check
      _
    $region11: #{tpu_custom_call.1} parent=1 // pred_check_branch
      %46 = sbr.rel (0) target = $region13
    $region12: #{tpu_custom_call.1} parent=1 // pred_region
      %s48 = ssub.s32 16, 16
      %49 = vsyncadd [#allocation8], %s48
      %s51 = sshll.u32 [#allocation9], 4
      %s52 = int_to_ptr.vmem [resolvable:$true] %s51
      %54 = dma.hbm_to_vmem [thread:$0]  %s2, 16, %s52, [#allocation8]
    $region13: #{tpu_custom_call.1} parent=1 // pred_fallthru
      _
    // Predicated region
    $region14: #{tpu_custom_call.1} parent=1 // pred_check
      _
    $region15: #{tpu_custom_call.1} parent=1 // pred_check_branch
      %56 = sbr.rel (0) target = $region17
    $region16: #{tpu_custom_call.1} parent=1 // pred_region
      %s58 = ssub.s32 1024, 1024
      %59 = vsyncadd [#allocation11], %s58
      %s60 = sshll.u32 [#allocation10], 4
      %s61 = int_to_ptr.vmem [resolvable:$true] %s60
      %66 = dma.hbm_to_vmem [thread:$0]  %s3, 1024, %s61, [#allocation11], 64, 64, 4
    $region17: #{tpu_custom_call.1} parent=1 // pred_fallthru
      _
    // Predicated region
    $region18: #{tpu_custom_call.1} parent=1 // pred_check
      _
    $region19: #{tpu_custom_call.1} parent=1 // pred_check_branch
      %68 = sbr.rel (0) target = $region21
    $region20: #{tpu_custom_call.1} parent=1 // pred_region
      %s70 = ssub.s32 16, 16
      %71 = vsyncadd [#allocation11], %s70
      %s73 = sshll.u32 [#allocation12], 4
      %s74 = int_to_ptr.vmem [resolvable:$true] %s73
      %76 = dma.hbm_to_vmem [thread:$0]  %s4, 16, %s74, [#allocation11]
    $region21: #{tpu_custom_call.1} parent=1 // pred_fallthru
      _
    // Predicated region
    $region22: #{tpu_custom_call.1} parent=1 // pred_check
      _
    $region23: #{tpu_custom_call.1} parent=1 // pred_check_branch
      %78 = sbr.rel (0) target = $region25
    $region24: #{tpu_custom_call.1} parent=1 // pred_region
      %s80 = ssub.s32 1024, 1024
      %81 = vsyncadd [#allocation14], %s80
      %s82 = sshll.u32 [#allocation13], 4
      %s83 = int_to_ptr.vmem [resolvable:$true] %s82
      %88 = dma.hbm_to_vmem [thread:$0]  %s5, 1024, %s83, [#allocation14], 64, 64, 4
    $region25: #{tpu_custom_call.1} parent=1 // pred_fallthru
      _
    // Predicated region
    $region26: #{tpu_custom_call.1} parent=1 // pred_check
      _
    $region27: #{tpu_custom_call.1} parent=1 // pred_check_branch
      %90 = sbr.rel (0) target = $region29
    $region28: #{tpu_custom_call.1} parent=1 // pred_region
      %s92 = ssub.s32 16, 16
      %93 = vsyncadd [#allocation14], %s92
      %s95 = sshll.u32 [#allocation15], 4
      %s96 = int_to_ptr.vmem [resolvable:$true] %s95
      %98 = dma.hbm_to_vmem [thread:$0]  %s6, 16, %s96, [#allocation14]
    $region29: #{tpu_custom_call.1} parent=1 // pred_fallthru
      _
    // Predicated region
    $region30: #{tpu_custom_call.1} parent=1 // pred_check
      _
    $region31: #{tpu_custom_call.1} parent=1 // pred_check_branch
      %100 = sbr.rel (0) target = $region33
    $region32: #{tpu_custom_call.1} parent=1 // pred_region
      %s102 = ssub.s32 16, 16
      %103 = vsyncadd [#allocation17], %s102
      %s105 = sshll.u32 [#allocation16], 4
      %s106 = int_to_ptr.vmem [resolvable:$true] %s105
      %108 = dma.hbm_to_vmem [thread:$0]  %s7, 16, %s106, [#allocation17]
    $region33: #{tpu_custom_call.1} parent=1 // pred_fallthru
      _
    // Predicated region
    $region34: #{tpu_custom_call.1} parent=1 // pred_check
      _
    $region35: #{tpu_custom_call.1} parent=1 // pred_check_branch
      %110 = sbr.rel (0) target = $region37
    $region36: #{tpu_custom_call.1} parent=1 // pred_region
      %s112 = ssub.s32 16, 16
      %113 = vsyncadd [#allocation17], %s112
      %s115 = sshll.u32 [#allocation18], 4
      %s116 = int_to_ptr.vmem [resolvable:$true] %s115
      %118 = dma.hbm_to_vmem [thread:$0]  %s8, 16, %s116, [#allocation17]
    $region37: #{tpu_custom_call.1} parent=1 // pred_fallthru
      _
    // Predicated region
    $region38: #{tpu_custom_call.1} parent=1 // pred_check
      _
    $region39: #{tpu_custom_call.1} parent=1 // pred_check_branch
      %120 = sbr.rel (0) target = $region41
    $region40: #{tpu_custom_call.1} parent=1 // pred_region
      %s122 = ssub.s32 1024, 1024
      %123 = vsyncadd [#allocation20], %s122
      %s124 = sshll.u32 [#allocation19], 4
      %s125 = int_to_ptr.vmem [resolvable:$true] %s124
      %130 = dma.hbm_to_vmem [thread:$0]  %s9, 1024, %s125, [#allocation20], 64, 64, 4
    $region41: #{tpu_custom_call.1} parent=1 // pred_fallthru
      _
    // Predicated region
    $region42: #{tpu_custom_call.1} parent=1 // pred_check
      _
    $region43: #{tpu_custom_call.1} parent=1 // pred_check_branch
      %132 = sbr.rel (0) target = $region45
    $region44: #{tpu_custom_call.1} parent=1 // pred_region
      %s134 = ssub.s32 16, 16
      %135 = vsyncadd [#allocation20], %s134
      %s137 = sshll.u32 [#allocation21], 4
      %s138 = int_to_ptr.vmem [resolvable:$true] %s137
      %140 = dma.hbm_to_vmem [thread:$0]  %s10, 16, %s138, [#allocation20]
    $region45: #{tpu_custom_call.1} parent=1 // pred_fallthru
      _
    // Predicated region
    $region46: #{tpu_custom_call.1} parent=1 // pred_check
      _
    $region47: #{tpu_custom_call.1} parent=1 // pred_check_branch
      %142 = sbr.rel (0) target = $region49
    $region48: #{tpu_custom_call.1} parent=1 // pred_region
      %143 = dma.done [#allocation5], 256
    $region49: #{tpu_custom_call.1} parent=1 // pred_fallthru
      _
    // Predicated region
    $region50: #{tpu_custom_call.1} parent=1 // pred_check
      _
    $region51: #{tpu_custom_call.1} parent=1 // pred_check_branch
      %145 = sbr.rel (0) target = $region53
    $region52: #{tpu_custom_call.1} parent=1 // pred_region
      %146 = dma.done [#allocation8], 16
    $region53: #{tpu_custom_call.1} parent=1 // pred_fallthru
      _
    // Predicated region
    $region54: #{tpu_custom_call.1} parent=1 // pred_check
      _
    $region55: #{tpu_custom_call.1} parent=1 // pred_check_branch
      %148 = sbr.rel (0) target = $region57
    $region56: #{tpu_custom_call.1} parent=1 // pred_region
      %149 = dma.done [#allocation8], 16
    $region57: #{tpu_custom_call.1} parent=1 // pred_fallthru
      _
    // Predicated region
    $region58: #{tpu_custom_call.1} parent=1 // pred_check
      _
    $region59: #{tpu_custom_call.1} parent=1 // pred_check_branch
      %151 = sbr.rel (0) target = $region61
    $region60: #{tpu_custom_call.1} parent=1 // pred_region
      %152 = dma.done [#allocation11], 1024
    $region61: #{tpu_custom_call.1} parent=1 // pred_fallthru
      _
    // Predicated region
    $region62: #{tpu_custom_call.1} parent=1 // pred_check
      _
    $region63: #{tpu_custom_call.1} parent=1 // pred_check_branch
      %154 = sbr.rel (0) target = $region65
    $region64: #{tpu_custom_call.1} parent=1 // pred_region
      %155 = dma.done [#allocation11], 16
    $region65: #{tpu_custom_call.1} parent=1 // pred_fallthru
      _
    // Predicated region
    $region66: #{tpu_custom_call.1} parent=1 // pred_check
      _
    $region67: #{tpu_custom_call.1} parent=1 // pred_check_branch
      %157 = sbr.rel (0) target = $region69
    $region68: #{tpu_custom_call.1} parent=1 // pred_region
      %158 = dma.done [#allocation14], 1024
    $region69: #{tpu_custom_call.1} parent=1 // pred_fallthru
      _
    // Predicated region
    $region70: #{tpu_custom_call.1} parent=1 // pred_check
      _
    $region71: #{tpu_custom_call.1} parent=1 // pred_check_branch
      %160 = sbr.rel (0) target = $region73
    $region72: #{tpu_custom_call.1} parent=1 // pred_region
      %161 = dma.done [#allocation14], 16
    $region73: #{tpu_custom_call.1} parent=1 // pred_fallthru
      _
    // Predicated region
    $region74: #{tpu_custom_call.1} parent=1 // pred_check
      _
    $region75: #{tpu_custom_call.1} parent=1 // pred_check_branch
      %163 = sbr.rel (0) target = $region77
    $region76: #{tpu_custom_call.1} parent=1 // pred_region
      %164 = dma.done [#allocation17], 16
    $region77: #{tpu_custom_call.1} parent=1 // pred_fallthru
      _
    // Predicated region
    $region78: #{tpu_custom_call.1} parent=1 // pred_check
      _
    $region79: #{tpu_custom_call.1} parent=1 // pred_check_branch
      %166 = sbr.rel (0) target = $region81
    $region80: #{tpu_custom_call.1} parent=1 // pred_region
      %167 = dma.done [#allocation17], 16
    $region81: #{tpu_custom_call.1} parent=1 // pred_fallthru
      _
    // Predicated region
    $region82: #{tpu_custom_call.1} parent=1 // pred_check
      _
    $region83: #{tpu_custom_call.1} parent=1 // pred_check_branch
      %169 = sbr.rel (0) target = $region85
    $region84: #{tpu_custom_call.1} parent=1 // pred_region
      %170 = dma.done [#allocation20], 1024
    $region85: #{tpu_custom_call.1} parent=1 // pred_fallthru
      _
    // Predicated region
    $region86: #{tpu_custom_call.1} parent=1 // pred_check
      _
    $region87: #{tpu_custom_call.1} parent=1 // pred_check_branch
      %172 = sbr.rel (0) target = $region89
    $region88: #{tpu_custom_call.1} parent=1 // pred_region
      %173 = dma.done [#allocation20], 16
    $region89: #{tpu_custom_call.1} parent=1 // pred_fallthru
      _
    %p175 = scmp.eq.s32.totalorder 0, 0
    // Predicated region
    $region90: #{tpu_custom_call.1} parent=1 // pred_check
      %p176 = pneg %p175
    $region91: #{tpu_custom_call.1} parent=1 // pred_check_branch
      %178 = sbr.rel (%p176) target = $region93
    $region92: #{tpu_custom_call.1} parent=1 // pred_region
      %v179 = vld [vmem:[#allocation4] sm:$0xff]
      %v180 = vld [vmem:[#allocation4 + $0x8] sm:$0xff]
      %181 = vadd.xlane.f32.xlu0 %v179
      %v182 = vpop.xlane.xlu0 %181
      %183 = vadd.xlane.f32.xlu0 %v180
      %v184 = vpop.xlane.xlu0 %183
      %v185 = vmul.f32 %v179, %v179
      %v186 = vmul.f32 %v180, %v180
      %187 = vadd.xlane.f32.xlu0 %v185
      %v188 = vpop.xlane.xlu0 %187
      %189 = vadd.xlane.f32.xlu0 %v186
      %v190 = vpop.xlane.xlu0 %189
      %v191 = vmul.f32 %v182, 0.03125
      %v192 = vmul.f32 %v184, 0.03125
      %v193 = vmul.f32 %v188, 0.03125
      %v194 = vmul.f32 %v190, 0.03125
      %v195 = vmul.f32 %v191, %v191
      %v196 = vmul.f32 %v192, %v192
      %v197 = vsub.f32 %v193, %v195
      %v198 = vsub.f32 %v194, %v196
      %v199 = vmax.f32 %v197, 0.0
      %v200 = vmax.f32 %v198, 0.0
      %v201 = vsub.f32 %v179, %v191
      %v202 = vsub.f32 %v180, %v192
      %v203 = vadd.f32 %v199, 1e-05
      %v204 = vadd.f32 %v200, 1e-05
      %v205 = vrsqrt.pop %v203
      %v206 = vrsqrt.pop %v204
      %v207 = vmul.f32 %v201, %v205
      %v208 = vmul.f32 %v202, %v206
      %v209 = vld [vmem:[#allocation7] sm:$0x1]
      %v211 = vlaneseq
      %v212 = vshrl.u32 %v211, 7
      %v213 = vsub.s32 0, %v212
      %v214 = vrot.slane %v209, %v213
      %v216 = vmul.f32 %v207, %v214
      %v217 = vmul.f32 %v208, %v214
      %v218 = vld [vmem:[#allocation9] sm:$0x1]
      %v220 = vlaneseq
      %v221 = vshrl.u32 %v220, 7
      %v222 = vsub.s32 0, %v221
      %v223 = vrot.slane %v218, %v222
      %v225 = vadd.f32 %v216, %v223
      %v226 = vadd.f32 %v217, %v223
      %v227 = vpack.c.bf16 %v226, %v225
      %228 = vst [vmem:[#allocation2] sm:$0xff] %v227
      %229 = vst [vmem:[#allocation3] sm:$0xff] 0.0
      %230 = vst [vmem:[#allocation3 + $0x8] sm:$0xff] 0.0
    $region93: #{tpu_custom_call.1} parent=1 // pred_fallthru
      _
    %v231 = vld [vmem:[#allocation2] sm:$0xff]
    %v232 = vld [vmem:[#allocation10] sm:$0xf]
    %v233 = vld [vmem:[#allocation10 + $0x4] sm:$0xf]
    %v234 = vld [vmem:[#allocation10 + $0x8] sm:$0xf]
    %v235 = vld [vmem:[#allocation10 + $0xc] sm:$0xf]
    %v236 = vld [vmem:[#allocation10 + $0x10] sm:$0xf]
    %v237 = vld [vmem:[#allocation10 + $0x14] sm:$0xf]
    %v238 = vld [vmem:[#allocation10 + $0x18] sm:$0xf]
    %v239 = vld [vmem:[#allocation10 + $0x1c] sm:$0xf]
    %v240 = vld [vmem:[#allocation10 + $0x20] sm:$0xf]
    %v241 = vld [vmem:[#allocation10 + $0x24] sm:$0xf]
    %v242 = vld [vmem:[#allocation10 + $0x28] sm:$0xf]
    %v243 = vld [vmem:[#allocation10 + $0x2c] sm:$0xf]
    %v244 = vld [vmem:[#allocation10 + $0x30] sm:$0xf]
    %v245 = vld [vmem:[#allocation10 + $0x34] sm:$0xf]
    %v246 = vld [vmem:[#allocation10 + $0x38] sm:$0xf]
    %v247 = vld [vmem:[#allocation10 + $0x3c] sm:$0xf]
    %v248 = vld [vmem:[#allocation12] sm:$0x1]
    %v250 = vlaneseq
    %v251 = vshrl.u32 %v250, 7
    %v252 = vsub.s32 0, %v251
    %v253 = vrot.slane %v248, %v252
    %v271 = vunpack.c.l.b16 %v232
    %v272 = vunpack.c.l.b16 %v233
    %v273 = vunpack.c.l.b16 %v234
    %v274 = vunpack.c.l.b16 %v235
    %v275 = vunpack.c.l.b16 %v236
    %v276 = vunpack.c.l.b16 %v237
    %v277 = vunpack.c.l.b16 %v238
    %v278 = vunpack.c.l.b16 %v239
    %v279 = vunpack.c.l.b16 %v240
    %v280 = vunpack.c.l.b16 %v241
    %v281 = vunpack.c.l.b16 %v242
    %v282 = vunpack.c.l.b16 %v243
    %v283 = vunpack.c.l.b16 %v244
    %v284 = vunpack.c.l.b16 %v245
    %v285 = vunpack.c.l.b16 %v246
    %v286 = vunpack.c.l.b16 %v247
    %v287 = vpack.c.b16 %v272, %v271
    %v288 = vpack.c.b16 %v274, %v273
    %v289 = vpack.c.b16 %v276, %v275
    %v290 = vpack.c.b16 %v278, %v277
    %v291 = vpack.c.b16 %v280, %v279
    %v292 = vpack.c.b16 %v282, %v281
    %v293 = vpack.c.b16 %v284, %v283
    %v294 = vpack.c.b16 %v286, %v285
    %303 = vmatprep.subr.bf16.mxu0 0
    %304 = vmatpush1.bf16.msra.mxu0 %v287
    %305 = vmatprep.subr.bf16.mxu0 0
    %306 = vmatpush1.bf16.msra.mxu0 %v288
    %307 = vmatprep.subr.bf16.mxu0 0
    %308 = vmatpush1.bf16.msra.mxu0 %v289
    %309 = vmatprep.subr.bf16.mxu0 0
    %310 = vmatpush1.bf16.msra.mxu0 %v290
    %311 = vmatprep.subr.bf16.mxu0 0
    %312 = vmatpush1.bf16.msra.mxu0 %v291
    %313 = vmatprep.subr.bf16.mxu0 0
    %314 = vmatpush1.bf16.msra.mxu0 %v292
    %315 = vmatprep.subr.bf16.mxu0 0
    %316 = vmatpush1.bf16.msra.mxu0 %v293
    %317 = vmatprep.subr.bf16.mxu0 0
    %318 = vmatpush1.bf16.msra.mxu0 %v294
    %319 = vmatprep.subr.bf16.mxu0 0
    %320 = vmatpush1.bf16.msra.mxu0 0
    %321 = vmatprep.subr.bf16.mxu0 0
    %322 = vmatpush1.bf16.msra.mxu0 0
    %323 = vmatprep.subr.bf16.mxu0 0
    %324 = vmatpush1.bf16.msra.mxu0 0
    %325 = vmatprep.subr.bf16.mxu0 0
    %326 = vmatpush1.bf16.msra.mxu0 0
    %327 = vmatprep.subr.bf16.mxu0 0
    %328 = vmatpush1.bf16.msra.mxu0 0
    %329 = vmatprep.subr.bf16.mxu0 0
    %330 = vmatpush1.bf16.msra.mxu0 0
    %331 = vmatprep.subr.bf16.mxu0 0
    %332 = vmatpush1.bf16.msra.mxu0 0
    %333 = vmatprep.subr.bf16.mxu0 0
    %334 = vmatpush1.bf16.msra.mxu0 0
    %335 = vmatprep.mubr.bf16.mxu0 0
    %336 = vmatmul.mubr.bf16.gmra.mrb[0].mxu0 %v231
    %v337 = vpop.f32.mrb[0].mxu0
    %v338 = vadd.f32 %v253, %v337
    %v339 = vpop.f32.mrb[0].mxu0
    %v340 = vpop.f32.mrb[0].mxu0
    %v341 = vadd.f32 %v253, %v340
    %v342 = vpop.f32.mrb[0].mxu0
    %343 = vdwg.mxu0
    %v344 = vmul.f32 %v338, 0.5
    %v345 = vmul.f32 %v341, 0.5
    %v346 = vmul.f32 %v338, 0.70710677
    %v347 = vmul.f32 %v341, 0.70710677
    %v348 = verf.f32.pop %v346
    %v349 = verf.f32.pop %v347
    %v350 = vadd.f32 %v348, 1.0
    %v351 = vadd.f32 %v349, 1.0
    %v352 = vmul.f32 %v344, %v350
    %v353 = vmul.f32 %v345, %v351
    %v354 = vld [vmem:[#allocation3] sm:$0xff]
    %v355 = vld [vmem:[#allocation3 + $0x8] sm:$0xff]
    %v356 = vpack.c.bf16 %v353, %v352
    %v357 = vld [vmem:[#allocation13] sm:$0xf]
    %v358 = vld [vmem:[#allocation13 + $0x4] sm:$0xf]
    %v359 = vld [vmem:[#allocation13 + $0x8] sm:$0xf]
    %v360 = vld [vmem:[#allocation13 + $0xc] sm:$0xf]
    %v361 = vld [vmem:[#allocation13 + $0x10] sm:$0xf]
    %v362 = vld [vmem:[#allocation13 + $0x14] sm:$0xf]
    %v363 = vld [vmem:[#allocation13 + $0x18] sm:$0xf]
    %v364 = vld [vmem:[#allocation13 + $0x1c] sm:$0xf]
    %v365 = vld [vmem:[#allocation13 + $0x20] sm:$0xf]
    %v366 = vld [vmem:[#allocation13 + $0x24] sm:$0xf]
    %v367 = vld [vmem:[#allocation13 + $0x28] sm:$0xf]
    %v368 = vld [vmem:[#allocation13 + $0x2c] sm:$0xf]
    %v369 = vld [vmem:[#allocation13 + $0x30] sm:$0xf]
    %v370 = vld [vmem:[#allocation13 + $0x34] sm:$0xf]
    %v371 = vld [vmem:[#allocation13 + $0x38] sm:$0xf]
    %v372 = vld [vmem:[#allocation13 + $0x3c] sm:$0xf]
    %v389 = vunpack.c.l.b16 %v357
    %v390 = vunpack.c.l.b16 %v358
    %v391 = vunpack.c.l.b16 %v359
    %v392 = vunpack.c.l.b16 %v360
    %v393 = vunpack.c.l.b16 %v361
    %v394 = vunpack.c.l.b16 %v362
    %v395 = vunpack.c.l.b16 %v363
    %v396 = vunpack.c.l.b16 %v364
    %v397 = vunpack.c.l.b16 %v365
    %v398 = vunpack.c.l.b16 %v366
    %v399 = vunpack.c.l.b16 %v367
    %v400 = vunpack.c.l.b16 %v368
    %v401 = vunpack.c.l.b16 %v369
    %v402 = vunpack.c.l.b16 %v370
    %v403 = vunpack.c.l.b16 %v371
    %v404 = vunpack.c.l.b16 %v372
    %v405 = vpack.c.b16 %v390, %v389
    %v406 = vpack.c.b16 %v392, %v391
    %v407 = vpack.c.b16 %v394, %v393
    %v408 = vpack.c.b16 %v396, %v395
    %v409 = vpack.c.b16 %v398, %v397
    %v410 = vpack.c.b16 %v400, %v399
    %v411 = vpack.c.b16 %v402, %v401
    %v412 = vpack.c.b16 %v404, %v403
    %421 = vmatprep.subr.bf16.mxu0 0
    %422 = vmatpush1.bf16.msra.mxu0 %v405
    %423 = vmatprep.subr.bf16.mxu0 0
    %424 = vmatpush1.bf16.msra.mxu0 %v406
    %425 = vmatprep.subr.bf16.mxu0 0
    %426 = vmatpush1.bf16.msra.mxu0 %v407
    %427 = vmatprep.subr.bf16.mxu0 0
    %428 = vmatpush1.bf16.msra.mxu0 %v408
    %429 = vmatprep.subr.bf16.mxu0 0
    %430 = vmatpush1.bf16.msra.mxu0 %v409
    %431 = vmatprep.subr.bf16.mxu0 0
    %432 = vmatpush1.bf16.msra.mxu0 %v410
    %433 = vmatprep.subr.bf16.mxu0 0
    %434 = vmatpush1.bf16.msra.mxu0 %v411
    %435 = vmatprep.subr.bf16.mxu0 0
    %436 = vmatpush1.bf16.msra.mxu0 %v412
    %437 = vmatprep.subr.bf16.mxu0 0
    %438 = vmatpush1.bf16.msra.mxu0 0
    %439 = vmatprep.subr.bf16.mxu0 0
    %440 = vmatpush1.bf16.msra.mxu0 0
    %441 = vmatprep.subr.bf16.mxu0 0
    %442 = vmatpush1.bf16.msra.mxu0 0
    %443 = vmatprep.subr.bf16.mxu0 0
    %444 = vmatpush1.bf16.msra.mxu0 0
    %445 = vmatprep.subr.bf16.mxu0 0
    %446 = vmatpush1.bf16.msra.mxu0 0
    %447 = vmatprep.subr.bf16.mxu0 0
    %448 = vmatpush1.bf16.msra.mxu0 0
    %449 = vmatprep.subr.bf16.mxu0 0
    %450 = vmatpush1.bf16.msra.mxu0 0
    %451 = vmatprep.subr.bf16.mxu0 0
    %452 = vmatpush1.bf16.msra.mxu0 0
    %453 = vmatprep.mubr.bf16.mxu0 0
    %454 = vmatmul.mubr.bf16.gmra.mrb[0].mxu0 %v356
    %v455 = vpop.f32.mrb[0].mxu0
    %v456 = vadd.f32 0.0, %v455
    %v457 = vpop.f32.mrb[0].mxu0
    %v458 = vpop.f32.mrb[0].mxu0
    %v459 = vadd.f32 0.0, %v458
    %v460 = vpop.f32.mrb[0].mxu0
    %461 = vdwg.mxu0
    %v462 = vadd.f32 %v354, %v456
    %v463 = vadd.f32 %v355, %v459
    %464 = vst [vmem:[#allocation3] sm:$0xff] %v462
    %465 = vst [vmem:[#allocation3 + $0x8] sm:$0xff] %v463
    // Predicated region
    $region94: #{tpu_custom_call.1} parent=1 // pred_check
      %p466 = pneg %p175
    $region95: #{tpu_custom_call.1} parent=1 // pred_check_branch
      %468 = sbr.rel (%p466) target = $region97
    $region96: #{tpu_custom_call.1} parent=1 // pred_region
      %v469 = vld [vmem:[#allocation4] sm:$0xff]
      %v470 = vld [vmem:[#allocation4 + $0x8] sm:$0xff]
      %v471 = vld [vmem:[#allocation3] sm:$0xff]
      %v472 = vld [vmem:[#allocation3 + $0x8] sm:$0xff]
      %v473 = vadd.f32 %v469, %v471
      %v474 = vadd.f32 %v470, %v472
      %v475 = vld [vmem:[#allocation15] sm:$0x1]
      %v477 = vlaneseq
      %v478 = vshrl.u32 %v477, 7
      %v479 = vsub.s32 0, %v478
      %v480 = vrot.slane %v475, %v479
      %v482 = vadd.f32 %v473, %v480
      %v483 = vadd.f32 %v474, %v480
      %484 = vadd.xlane.f32.xlu0 %v482
      %v485 = vpop.xlane.xlu0 %484
      %486 = vadd.xlane.f32.xlu0 %v483
      %v487 = vpop.xlane.xlu0 %486
      %v488 = vmul.f32 %v482, %v482
      %v489 = vmul.f32 %v483, %v483
      %490 = vadd.xlane.f32.xlu0 %v488
      %v491 = vpop.xlane.xlu0 %490
      %492 = vadd.xlane.f32.xlu0 %v489
      %v493 = vpop.xlane.xlu0 %492
      %v494 = vmul.f32 %v485, 0.03125
      %v495 = vmul.f32 %v487, 0.03125
      %v496 = vmul.f32 %v491, 0.03125
      %v497 = vmul.f32 %v493, 0.03125
      %v498 = vmul.f32 %v494, %v494
      %v499 = vmul.f32 %v495, %v495
      %v500 = vsub.f32 %v496, %v498
      %v501 = vsub.f32 %v497, %v499
      %v502 = vmax.f32 %v500, 0.0
      %v503 = vmax.f32 %v501, 0.0
      %v504 = vsub.f32 %v482, %v494
      %v505 = vsub.f32 %v483, %v495
      %v506 = vadd.f32 %v502, 1e-05
      %v507 = vadd.f32 %v503, 1e-05
      %v508 = vrsqrt.pop %v506
      %v509 = vrsqrt.pop %v507
      %v510 = vmul.f32 %v504, %v508
      %v511 = vmul.f32 %v505, %v509
      %v512 = vld [vmem:[#allocation16] sm:$0x1]
      %v514 = vlaneseq
      %v515 = vshrl.u32 %v514, 7
      %v516 = vsub.s32 0, %v515
      %v517 = vrot.slane %v512, %v516
      %v519 = vmul.f32 %v510, %v517
      %v520 = vmul.f32 %v511, %v517
      %v521 = vld [vmem:[#allocation18] sm:$0x1]
      %v523 = vlaneseq
      %v524 = vshrl.u32 %v523, 7
      %v525 = vsub.s32 0, %v524
      %v526 = vrot.slane %v521, %v525
      %v528 = vadd.f32 %v519, %v526
      %v529 = vadd.f32 %v520, %v526
      %v530 = vpack.c.bf16 %v529, %v528
      %v531 = vld [vmem:[#allocation19] sm:$0xf]
      %v532 = vld [vmem:[#allocation19 + $0x4] sm:$0xf]
      %v533 = vld [vmem:[#allocation19 + $0x8] sm:$0xf]
      %v534 = vld [vmem:[#allocation19 + $0xc] sm:$0xf]
      %v535 = vld [vmem:[#allocation19 + $0x10] sm:$0xf]
      %v536 = vld [vmem:[#allocation19 + $0x14] sm:$0xf]
      %v537 = vld [vmem:[#allocation19 + $0x18] sm:$0xf]
      %v538 = vld [vmem:[#allocation19 + $0x1c] sm:$0xf]
      %v539 = vld [vmem:[#allocation19 + $0x20] sm:$0xf]
      %v540 = vld [vmem:[#allocation19 + $0x24] sm:$0xf]
      %v541 = vld [vmem:[#allocation19 + $0x28] sm:$0xf]
      %v542 = vld [vmem:[#allocation19 + $0x2c] sm:$0xf]
      %v543 = vld [vmem:[#allocation19 + $0x30] sm:$0xf]
      %v544 = vld [vmem:[#allocation19 + $0x34] sm:$0xf]
      %v545 = vld [vmem:[#allocation19 + $0x38] sm:$0xf]
      %v546 = vld [vmem:[#allocation19 + $0x3c] sm:$0xf]
      %v547 = vld [vmem:[#allocation21] sm:$0x1]
      %v549 = vlaneseq
      %v550 = vshrl.u32 %v549, 7
      %v551 = vsub.s32 0, %v550
      %v552 = vrot.slane %v547, %v551
      %v570 = vunpack.c.l.b16 %v531
      %v571 = vunpack.c.l.b16 %v532
      %v572 = vunpack.c.l.b16 %v533
      %v573 = vunpack.c.l.b16 %v534
      %v574 = vunpack.c.l.b16 %v535
      %v575 = vunpack.c.l.b16 %v536
      %v576 = vunpack.c.l.b16 %v537
      %v577 = vunpack.c.l.b16 %v538
      %v578 = vunpack.c.l.b16 %v539
      %v579 = vunpack.c.l.b16 %v540
      %v580 = vunpack.c.l.b16 %v541
      %v581 = vunpack.c.l.b16 %v542
      %v582 = vunpack.c.l.b16 %v543
      %v583 = vunpack.c.l.b16 %v544
      %v584 = vunpack.c.l.b16 %v545
      %v585 = vunpack.c.l.b16 %v546
      %v586 = vpack.c.b16 %v571, %v570
      %v587 = vpack.c.b16 %v573, %v572
      %v588 = vpack.c.b16 %v575, %v574
      %v589 = vpack.c.b16 %v577, %v576
      %v590 = vpack.c.b16 %v579, %v578
      %v591 = vpack.c.b16 %v581, %v580
      %v592 = vpack.c.b16 %v583, %v582
      %v593 = vpack.c.b16 %v585, %v584
      %602 = vmatprep.subr.bf16.mxu0 0
      %603 = vmatpush1.bf16.msra.mxu0 %v586
      %604 = vmatprep.subr.bf16.mxu0 0
      %605 = vmatpush1.bf16.msra.mxu0 %v587
      %606 = vmatprep.subr.bf16.mxu0 0
      %607 = vmatpush1.bf16.msra.mxu0 %v588
      %608 = vmatprep.subr.bf16.mxu0 0
      %609 = vmatpush1.bf16.msra.mxu0 %v589
      %610 = vmatprep.subr.bf16.mxu0 0
      %611 = vmatpush1.bf16.msra.mxu0 %v590
      %612 = vmatprep.subr.bf16.mxu0 0
      %613 = vmatpush1.bf16.msra.mxu0 %v591
      %614 = vmatprep.subr.bf16.mxu0 0
      %615 = vmatpush1.bf16.msra.mxu0 %v592
      %616 = vmatprep.subr.bf16.mxu0 0
      %617 = vmatpush1.bf16.msra.mxu0 %v593
      %618 = vmatprep.subr.bf16.mxu0 0
      %619 = vmatpush1.bf16.msra.mxu0 0
      %620 = vmatprep.subr.bf16.mxu0 0
      %621 = vmatpush1.bf16.msra.mxu0 0
      %622 = vmatprep.subr.bf16.mxu0 0
      %623 = vmatpush1.bf16.msra.mxu0 0
      %624 = vmatprep.subr.bf16.mxu0 0
      %625 = vmatpush1.bf16.msra.mxu0 0
      %626 = vmatprep.subr.bf16.mxu0 0
      %627 = vmatpush1.bf16.msra.mxu0 0
      %628 = vmatprep.subr.bf16.mxu0 0
      %629 = vmatpush1.bf16.msra.mxu0 0
      %630 = vmatprep.subr.bf16.mxu0 0
      %631 = vmatpush1.bf16.msra.mxu0 0
      %632 = vmatprep.subr.bf16.mxu0 0
      %633 = vmatpush1.bf16.msra.mxu0 0
      %634 = vmatprep.mubr.bf16.mxu0 0
      %635 = vmatmul.mubr.bf16.gmra.mrb[0].mxu0 %v530
      %v636 = vpop.f32.mrb[0].mxu0
      %v637 = vadd.f32 %v552, %v636
      %v638 = vpop.f32.mrb[0].mxu0
      %v639 = vpop.f32.mrb[0].mxu0
      %v640 = vadd.f32 %v552, %v639
      %v641 = vpop.f32.mrb[0].mxu0
      %642 = vdwg.mxu0
      %643 = vst [vmem:[#allocation22] sm:$0xff] %v637
      %644 = vst [vmem:[#allocation22 + $0x8] sm:$0xff] %v640
    $region97: #{tpu_custom_call.1} parent=1 // pred_fallthru
      _
    // Predicated region
    $region98: #{tpu_custom_call.1} parent=1 // pred_check
      _
    $region99: #{tpu_custom_call.1} parent=1 // pred_check_branch
      %646 = sbr.rel (0) target = $region101
    $region100: #{tpu_custom_call.1} parent=1 // pred_region
      %s648 = ssub.s32 256, 256
      %649 = vsyncadd [#allocation6], %s648
      %s650 = sshll.u32 [#allocation22], 4
      %s651 = int_to_ptr.vmem [resolvable:$true] %s650
      %656 = dma.vmem_to_hbm [thread:$0]  %s651, 256, %s11, [#allocation6], 128, 128, 8
    $region101: #{tpu_custom_call.1} parent=1 // pred_fallthru
      _
    // Predicated region
    $region102: #{tpu_custom_call.1} parent=1 // pred_check
      _
    $region103: #{tpu_custom_call.1} parent=1 // pred_check_branch
      %658 = sbr.rel (0) target = $region105
    $region104: #{tpu_custom_call.1} parent=1 // pred_region
      %659 = dma.done [#allocation6], 256
    $region105: #{tpu_custom_call.1} parent=1 // pred_fallthru
      _
    %660 = vsyncpa [#allocation5], 1
    %661 = vsyncpa [#allocation8], 1
    %662 = vsyncpa [#allocation11], 1
    %663 = vsyncpa [#allocation14], 1
    %664 = vsyncpa [#allocation17], 1
    %665 = vsyncpa [#allocation20], 1
    %666 = vsyncpa [#allocation6], 1

</llo_original>
